<compile_context>
chip_gen: v5e
topology: v5e:2x2
jax: 0.10.0
libtpu: 0.0.40
codegen_flags: <defaults>
</compile_context>

<pallas_src>
import functools

import jax
import jax.numpy as jnp
import numpy as np
from jax import lax
from jax.experimental import pallas as pl
from jax.experimental.pallas import tpu as pltpu

EPS = 1e-5
NUM_GROUPS = 8


@functools.lru_cache(maxsize=1)
def _roll_matches_jnp() -> bool:
    """Sign-convention guard for pltpu.roll: True iff it matches jnp.roll."""
    def probe(x_ref, o_ref):
        o_ref[...] = pltpu.roll(x_ref[...], 1, 1)

    x = jnp.broadcast_to(jnp.arange(128, dtype=jnp.float32), (8, 128))
    y = pl.pallas_call(probe, out_shape=jax.ShapeDtypeStruct((8, 128), jnp.float32))(x)
    # jnp.roll convention: out[0, 1] == in[0, 0] == 0
    return bool(np.asarray(y)[0, 1] == 0.0)


def max_filtering_kernel(H, W, B_blk, roll_like_jnp,
                         x_ref, w_ref, b_ref, g_ref, gt_ref, gamma_ref, beta_ref,
                         o_ref, slab_ref):
    # x_ref:  (B_blk, C, HW) f32  channels on sublanes, pixels on the 128-lane axis
    # w_ref:  (C, 9C)        bf16 im2col conv weight (tap-major columns)
    # b_ref / gamma_ref / beta_ref: (C, 1) f32
    # g_ref:  (C, 8) f32 one-hot channel->group ; gt_ref: (8, C) = g_ref.T
    # slab_ref: (9C, B_blk*HW) bf16 VMEM scratch (im2col slab for the whole block)
    C = x_ref.shape[1]
    HW = H * W
    BHW = B_blk * HW
    f32 = jnp.float32

    def shift_px(src, off):
        # result[:, p] = src[:, (p + off) mod n]  (cyclic; boundaries fixed by masks)
        n = src.shape[-1]
        if off % n == 0:
            return src
        sh = (-off) % n if roll_like_jnp else off % n
        return pltpu.roll(src, sh, 1)            # XLU lane rotation (non-VALU slot)

    # ---- boundary masks: computed ONCE per grid step, reused by conv & pool --------
    pos = lax.broadcasted_iota(jnp.int32, (1, HW), 1)
    hrow = pos // W
    wcol = pos - hrow * W
    row_ok = {-1: (hrow >= 1).astype(f32), 1: (hrow <= H - 2).astype(f32)}
    col_ok = {-1: (wcol >= 1).astype(f32), 1: (wcol <= W - 2).astype(f32)}
    conv_mask = {}                               # multiplicative 0/1 = zero padding
    for dr in (-1, 0, 1):
        for dc in (-1, 0, 1):
            if dr == 0 and dc == 0:
                continue
            if dr == 0:
                conv_mask[(dr, dc)] = col_ok[dc]
            elif dc == 0:
                conv_mask[(dr, dc)] = row_ok[dr]
            else:
                conv_mask[(dr, dc)] = row_ok[dr] * col_ok[dc]

    posb = lax.broadcasted_iota(jnp.int32, (1, BHW), 1)
    hrow_b = (posb // W) % H                     # row / col within each image
    wcol_b = posb - (posb // W) * W
    neg = jnp.float32(-jnp.inf)
    zero = jnp.float32(0.0)
    pool_up = jnp.where(hrow_b >= 1, zero, neg)          # additive -inf padding
    pool_down = jnp.where(hrow_b <= H - 2, zero, neg)
    pool_left = jnp.where(wcol_b >= 1, zero, neg)
    pool_right = jnp.where(wcol_b <= W - 2, zero, neg)

    # ---- 3x3 conv (stride 1, zero pad 1) as ONE fused-K matmul over the block ------
    # slab rows [t*C,(t+1)*C), cols [b*HW,(b+1)*HW): tap-t shifted, zero-masked image b.
    # Cross-image roll wrap only ever lands on masked boundary pixels.
    for b in range(B_blk):
        xb = x_ref[b]                            # (C, HW) f32
        c0 = b * HW
        for t in range(9):
            dr, dc = t // 3 - 1, t % 3 - 1
            v = shift_px(xb, dr * W + dc)
            if (dr, dc) != (0, 0):
                v = v * conv_mask[(dr, dc)]
            slab_ref[t * C:(t + 1) * C, c0:c0 + HW] = v.astype(jnp.bfloat16)

    # bf16 x bf16 -> f32 accumulate: single-pass MXU, RHS spans all B_blk images.
    feat = jnp.dot(w_ref[...], slab_ref[...],
                   preferred_element_type=f32) + b_ref[...]              # (C, BHW)

    # ---- separable 3x3 max pool (stride 1, -inf pad = PyTorch semantics) -----------
    rmax = jnp.maximum(feat,
                       jnp.maximum(shift_px(feat, -W) + pool_up,
                                   shift_px(feat, W) + pool_down))
    mp = jnp.maximum(rmax,
                     jnp.maximum(shift_px(rmax, -1) + pool_left,
                                 shift_px(rmax, 1) + pool_right))

    # ---- residual + GroupNorm(8, C) + ReLU, per image -------------------------------
    gsize = C // NUM_GROUPS
    cnt = jnp.float32(HW * gsize)
    hp = lax.Precision.HIGHEST        # tiny one-hot dots only: keeps f32 stats exact
    for b in range(B_blk):
        c0 = b * HW
        out = mp[:, c0:c0 + HW] + x_ref[b]                               # (C, HW)
        chan_sum = jnp.sum(out, axis=1, keepdims=True)                   # (C, 1) XLU
        chan_sq = jnp.sum(out * out, axis=1, keepdims=True)              # (C, 1)
        gsum = jnp.dot(gt_ref[...], chan_sum,
                       preferred_element_type=f32, precision=hp)         # (8, 1)
        gsq = jnp.dot(gt_ref[...], chan_sq,
                      preferred_element_type=f32, precision=hp)          # (8, 1)
        mean_g = gsum / cnt
        # single-pass E[x^2]-E[x]^2 variance; adequate at the validated tolerances
        var_g = gsq / cnt - mean_g * mean_g
        inv_g = lax.rsqrt(var_g + EPS)
        mean_c = jnp.dot(g_ref[...], mean_g,
                         preferred_element_type=f32, precision=hp)       # (C, 1)
        inv_c = jnp.dot(g_ref[...], inv_g,
                        preferred_element_type=f32, precision=hp)        # (C, 1)
        scale_c = inv_c * gamma_ref[...]         # fold gamma/beta -> one FMA per pixel
        shift_c = beta_ref[...] - mean_c * scale_c
        o_ref[b] = jnp.maximum(out * scale_c + shift_c, 0.0).astype(o_ref.dtype)


def _pick_batch_block(N, C, HW, budget_bytes=8 << 20):
    # largest divisor of N (capped at 8) whose per-step VMEM footprint fits the budget
    per_image = C * HW * (2 * 4 * 2 + 9 * 2 + 6 * 4)   # dbl-buf in/out + slab + temps
    best = 1
    for b in range(1, min(N, 8) + 1):
        if N % b == 0 and b * per_image <= budget_bytes:
            best = b
    return best


def _vmem_limit_bytes(C, HW, B_blk):
    per_image = C * HW * (2 * 4 * 2 + 9 * 2 + 6 * 4)
    consts = 2 * (9 * C * C * 2) + 2 * (6 * C * 4 + 8 * C * 4)
    est = B_blk * per_image + consts + (1 << 20)
    return int(min(64 << 20, max(32 << 20, int(est * 1.25))))


@functools.partial(jax.jit, static_argnames=("roll_like_jnp",))
def _max_filtering_impl(x_nchw, conv_w, conv_b, gamma, beta, *, roll_like_jnp):
    N, C, H, W = x_nchw.shape
    assert C % NUM_GROUPS == 0, "GroupNorm(8) requires C % 8 == 0"
    # C % 16 == 0 keeps every bf16 slab-chunk store at offset t*C on a (16,128) tile
    # boundary (full-tile unmasked vst); other C still works, just with masked stores.
    HW = H * W
    B_blk = _pick_batch_block(N, C, HW)

    # Data stays channels-first end to end: only free reshapes, no transposes.
    x = x_nchw.reshape(N, C, HW).astype(jnp.float32)
    # PyTorch conv weight (Cout, Cin, 3, 3) -> im2col layout (Cout, 9*Cin), tap-major,
    # cast to bf16 for a single-pass MXU matmul (f32 accumulation in-kernel).
    w_im2col = jnp.transpose(conv_w, (0, 2, 3, 1)).reshape(C, 9 * C).astype(jnp.bfloat16)
    b2 = conv_b.reshape(C, 1).astype(jnp.float32)
    gamma2 = gamma.reshape(C, 1).astype(jnp.float32)
    beta2 = beta.reshape(C, 1).astype(jnp.float32)
    gsize = C // NUM_GROUPS
    gmat = (jnp.arange(C)[:, None] // gsize ==
            jnp.arange(NUM_GROUPS)[None, :]).astype(jnp.float32)          # (C, 8)
    gtmat = gmat.T                                                        # (8, C)

    kernel = functools.partial(max_filtering_kernel, H, W, B_blk, roll_like_jnp)

    out = pl.pallas_call(
        kernel,
        out_shape=jax.ShapeDtypeStruct((N, C, HW), jnp.float32),
        grid_spec=pltpu.PrefetchScalarGridSpec(
            num_scalar_prefetch=0,
            grid=(N // B_blk,),
            in_specs=[
                pl.BlockSpec((B_blk, C, HW), lambda n: (n, 0, 0)),
                # grid-invariant operands: constant block index -> DMA'd only once
                pl.BlockSpec((C, 9 * C), lambda n: (0, 0)),
                pl.BlockSpec((C, 1), lambda n: (0, 0)),
                pl.BlockSpec((C, NUM_GROUPS), lambda n: (0, 0)),
                pl.BlockSpec((NUM_GROUPS, C), lambda n: (0, 0)),
                pl.BlockSpec((C, 1), lambda n: (0, 0)),
                pl.BlockSpec((C, 1), lambda n: (0, 0)),
            ],
            out_specs=pl.BlockSpec((B_blk, C, HW), lambda n: (n, 0, 0)),
            scratch_shapes=[pltpu.VMEM((9 * C, B_blk * HW), jnp.bfloat16)],
        ),
        compiler_params=pltpu.CompilerParams(
            dimension_semantics=("parallel",),
            vmem_limit_bytes=_vmem_limit_bytes(C, HW, B_blk)),
    )(x, w_im2col, b2, gmat, gtmat, gamma2, beta2)
    return out.reshape(N, C, H, W)


def max_filtering(x_nchw, conv_w, conv_b, gamma, beta):
    # Resolve the pltpu.roll sign convention eagerly (one tiny pallas_call, cached),
    # then dispatch the jitted, shape-cached fused kernel.
    return _max_filtering_impl(x_nchw, conv_w, conv_b, gamma, beta,
                               roll_like_jnp=_roll_matches_jnp())


def reference_forward(x_nchw, conv_w, conv_b, gamma, beta, *, bf16_matmul=True):
    """Pure-JAX reference of the PyTorch module (NCHW in / NCHW out).

    bf16_matmul=True mirrors the kernel's MXU precision (bf16 operands, f32 accumulate);
    bf16_matmul=False is the full-f32 (HIGHEST) reference.
    """
    N, C, H, W = x_nchw.shape
    xf = x_nchw.astype(jnp.float32)
    if bf16_matmul:
        lhs, rhs, prec = xf.astype(jnp.bfloat16), conv_w.astype(jnp.bfloat16), None
    else:
        lhs, rhs, prec = xf, conv_w.astype(jnp.float32), lax.Precision.HIGHEST
    feat = lax.conv_general_dilated(
        lhs, rhs, window_strides=(1, 1), padding=((1, 1), (1, 1)),
        dimension_numbers=("NCHW", "OIHW", "NCHW"),
        preferred_element_type=jnp.float32, precision=prec)
    feat = feat + conv_b.astype(jnp.float32)[None, :, None, None]
    mp = lax.reduce_window(feat, -jnp.inf, lax.max,
                           (1, 1, 3, 3), (1, 1, 1, 1),
                           [(0, 0), (0, 0), (1, 1), (1, 1)])
    out = mp + xf
    gs = C // NUM_GROUPS
    og = out.reshape(N, NUM_GROUPS, gs, H, W)
    mean = og.mean(axis=(2, 3, 4), keepdims=True)
    var = og.var(axis=(2, 3, 4), keepdims=True)
    y = ((og - mean) / jnp.sqrt(var + EPS)).reshape(N, C, H, W)
    y = (y * gamma.astype(jnp.float32)[None, :, None, None]
         + beta.astype(jnp.float32)[None, :, None, None])
    return jnp.maximum(y, 0.0)


if __name__ == "__main__":
    key = jax.random.PRNGKey(0)
    k_x, k_w, k_b, k_g, k_be = jax.random.split(key, 5)

    N, C, H, W = 2, 16, 16, 16                      # C must be divisible by 8
    x = jax.random.normal(k_x, (N, C, H, W), jnp.float32)             # NCHW (PyTorch)
    conv_w = 0.1 * jax.random.normal(k_w, (C, C, 3, 3), jnp.float32)  # (Cout, Cin, 3, 3)
    conv_b = 0.05 * jax.random.normal(k_b, (C,), jnp.float32)
    gamma = 1.0 + 0.1 * jax.random.normal(k_g, (C,), jnp.float32)
    beta = 0.05 * jax.random.normal(k_be, (C,), jnp.float32)

    out = max_filtering(x, conv_w, conv_b, gamma, beta)
    jax.block_until_ready(out)

    # Tight check vs. a reference that mirrors the MXU precision (bf16 in, f32 acc).
    ref_bf16 = reference_forward(x, conv_w, conv_b, gamma, beta, bf16_matmul=True)
    np.testing.assert_allclose(np.asarray(out), np.asarray(ref_bf16),
                               atol=1e-3, rtol=1e-3)

    # Sanity check vs. the full-f32 "PyTorch-exact" reference (bf16 MXU tolerance).
    ref_f32 = reference_forward(x, conv_w, conv_b, gamma, beta, bf16_matmul=False)
    np.testing.assert_allclose(np.asarray(out), np.asarray(ref_f32),
                               atol=5e-2, rtol=5e-2)

    print("KERNEL_OK")
</pallas_src>

<mosaic_0001>
module attributes {stable_mosaic.version = 11 : i64} {
  func.func @probe(%arg0: memref<8x128xf32, #tpu.memory_space<vmem>>, %arg1: memref<8x128xf32, #tpu.memory_space<vmem>>) attributes {dimension_semantics = [], scalar_prefetch = 0 : i64, scratch_operands = 0 : i64, tpu.core_type = #tpu.core_type<tc>} {
    %c0 = arith.constant 0 : index
    %c0_0 = arith.constant 0 : index
    %0 = vector.load %arg0[%c0, %c0_0] : memref<8x128xf32, #tpu.memory_space<vmem>>, vector<8x128xf32>
    %c1_i32 = arith.constant 1 : i32
    %1 = tpu.dynamic_rotate %0 by %c1_i32 dim 1 : vector<8x128xf32>, i32 -> vector<8x128xf32>
    %c0_1 = arith.constant 0 : index
    %c0_2 = arith.constant 0 : index
    %2 = vector.load %arg1[%c0_1, %c0_2] : memref<8x128xf32, #tpu.memory_space<vmem>>, vector<8x128xf32>
    tpu.vector_store %arg1[%c0_1, %c0_2], %1 {strides = array<i32>} : memref<8x128xf32, #tpu.memory_space<vmem>>, vector<8x128xf32>,
    return
  }
}

</mosaic_0001>

<llo_original>
// kernel: tpu_custom_call.1
$region0: #{tpu_custom_call.1}
  #allocation0 [shape = 'u32[]', space=smem, size = 0x4, offset = 0x4, fixed_abs, tag = 'smem constant byte address 0x4 - core index']
  #allocation1 [shape = 'u32[72,128]{1,0:T(1,128)}', space=vmem, size = 0x9000, scoped, tag = 'internal scratch']
  %s0 = inlined_call_operand.hbm [shape: f32[8,128], index: 0, kind: input, shape index: {}]
  %s1 = inlined_call_operand.hbm [shape: f32[8,128], index: 1, kind: output, shape index: {}]
  %s2 = sld [smem:[#allocation0]]
  $region18: #{tpu_custom_call.1} parent=0
    _
  %s4 = ssub.s32 1, %s2
  %s5 = scalar_select 0, %s4, %s2
  $region1: #{tpu_custom_call.1} parent=0
    #allocation2 [shape = 'u8[4096]{0}', space=vmem, size = 0x1000, scoped, tag = 'input window, operand 0, single buffered']
    #allocation3 [shape = 's32[1]{0}', space=sflag, size = 0x4, scoped, tag = 'scoped memory for tpu_custom_call.1']
    #allocation4 [shape = 's32[1]{0}', space=sflag, size = 0x4, scoped, tag = 'scoped memory for tpu_custom_call.1']
    #allocation5 [shape = 'u8[4096]{0}', space=vmem, size = 0x1000, scoped, tag = 'output window, operand 0, single buffered']
    %6 = vsyncpa [#allocation3], 0
    %7 = vsyncpa [#allocation4], 0
    // Predicated region
    $region2: #{tpu_custom_call.1} parent=1 // pred_check
      _
    $region3: #{tpu_custom_call.1} parent=1 // pred_check_branch
      %9 = sbr.rel (0) target = $region5
    $region4: #{tpu_custom_call.1} parent=1 // pred_region
      %11 = vsyncadd [#allocation3], 0
      %s13 = sshll.u32 %s0, 4
      %s14 = int_to_ptr.hbm [resolvable:$true] %s13
      %s15 = sshll.u32 [#allocation2], 4
      %s16 = int_to_ptr.vmem [resolvable:$true] %s15
      %18 = dma.hbm_to_vmem [thread:$0]  %s14, 128, %s16, [#allocation3]
    $region5: #{tpu_custom_call.1} parent=1 // pred_fallthru
      _
    // Predicated region
    $region6: #{tpu_custom_call.1} parent=1 // pred_check
      _
    $region7: #{tpu_custom_call.1} parent=1 // pred_check_branch
      %20 = sbr.rel (0) target = $region9
    $region8: #{tpu_custom_call.1} parent=1 // pred_region
      %22 = dma.done [#allocation3], 128
    $region9: #{tpu_custom_call.1} parent=1 // pred_fallthru
      _
    %v23 = vld [vmem:[#allocation2] sm:$0xff]
    %24 = vrot.lane.b32.xlu0 %v23, 1
    %v25 = vpop.permute.xlu0 %24
    %26 = vst [vmem:[#allocation5] sm:$0xff] %v25
    // Predicated region
    $region10: #{tpu_custom_call.1} parent=1 // pred_check
      _
    $region11: #{tpu_custom_call.1} parent=1 // pred_check_branch
      %28 = sbr.rel (0) target = $region13
    $region12: #{tpu_custom_call.1} parent=1 // pred_region
      %30 = vsyncadd [#allocation4], 0
      %s32 = sshll.u32 [#allocation5], 4
      %s33 = int_to_ptr.vmem [resolvable:$true] %s32
      %s34 = sshll.u32 %s1, 4
      %s35 = int_to_ptr.hbm [resolvable:$true] %s34
      %37 = dma.vmem_to_hbm [thread:$0]  %s33, 128, %s35, [#allocation4]
    $region13: #{tpu_custom_call.1} parent=1 // pred_fallthru
      _
    // Predicated region
    $region14: #{tpu_custom_call.1} parent=1 // pred_check
      _
    $region15: #{tpu_custom_call.1} parent=1 // pred_check_branch
      %39 = sbr.rel (0) target = $region17
    $region16: #{tpu_custom_call.1} parent=1 // pred_region
      %41 = dma.done [#allocation4], 128
    $region17: #{tpu_custom_call.1} parent=1 // pred_fallthru
      _
    %42 = vsyncpa [#allocation3], 1
    %43 = vsyncpa [#allocation4], 1

</llo_original>
